<compile_context>
chip_gen: v7x
topology: tpu7x:2x2x1
jax: 0.10.0
libtpu: 0.0.40
codegen_flags: <defaults>
</compile_context>

<pallas_src>
import functools

import jax
import jax.numpy as jnp
from jax import lax
from jax.experimental import pallas as pl
from jax.experimental.pallas import tpu as pltpu

LANES = 128
SUBLANES = 8


def _num_tensorcores():
    """2 on dual-TC / megacore chips (v4, v5p, v7x); 1 on v5e / v6e."""
    try:
        kind = jax.devices()[0].device_kind.lower()
    except Exception:
        return 1
    if "lite" in kind or "v5e" in kind or "v6" in kind:
        return 1
    if "v7" in kind or "v4" in kind or "v5p" in kind or "v5" in kind:
        return 2
    return 1


def _dice_bce_kernel(x_ref, t_ref, acc_ref, *, full_rows, rem, steps, tile_rows):
    c = pl.program_id(0)  # parallel (core) axis
    i = pl.program_id(1)  # arbitrary (reduction) axis

    @pl.when(i == 0)
    def _init():
        acc_ref[...] = jnp.zeros_like(acc_ref)

    # First logical row of this tile (row index, so no int32 overflow even for
    # multi-billion-element inputs).
    row0 = (c * steps + i) * tile_rows

    def accumulate(xm, tm):
        # PyTorch's binary_cross_entropy clamps the logs at -100.
        log_x = jnp.maximum(jnp.log(xm), -100.0)
        log_1mx = jnp.maximum(jnp.log(1.0 - xm), -100.0)
        inter_e = xm * tm
        sum_e = xm + tm                              # fused sum(x) + sum(t)
        ll_e = tm * (log_x - log_1mx) + log_1mx      # +log-likelihood; negated in wrapper

        # (tile_rows, 128) -> (8, 128) partial with pure vreg adds (no
        # cross-lane reduce per step); accumulate into the resident out block.
        def part(v):
            return jnp.sum(v.reshape(tile_rows // SUBLANES, SUBLANES, LANES),
                           axis=0)

        acc_ref[0, 0] += part(inter_e)
        acc_ref[0, 1] += part(sum_e)
        acc_ref[0, 2] += part(ll_e)

    # Fast path: every element of this tile is in range -> no mask work at all.
    is_full = row0 + tile_rows <= full_rows

    @pl.when(is_full)
    def _full_tile():
        accumulate(x_ref[...].astype(jnp.float32),
                   t_ref[...].astype(jnp.float32))

    # Slow path: last / overhanging tile, or a fully-clamped duplicate tile.
    @pl.when(jnp.logical_not(is_full))
    def _tail_tile():
        x = x_ref[...].astype(jnp.float32)
        t = t_ref[...].astype(jnp.float32)
        row_idx = lax.broadcasted_iota(jnp.int32, x.shape, 0) + row0
        if rem == 0:
            mask = row_idx < full_rows
        else:
            lane_idx = lax.broadcasted_iota(jnp.int32, x.shape, 1)
            mask = (row_idx < full_rows) | (
                (row_idx == full_rows) & (lane_idx < rem))
        accumulate(jnp.where(mask, x, 0.0), jnp.where(mask, t, 0.0))


def dice_bce_loss(inputs, targets, smooth=1.0, *, tile_rows=8192):
    """BCE(mean) + (1 - soft Dice), matching PyTorch DiceBCELoss.forward."""
    assert inputs.shape == targets.shape, "inputs/targets shape mismatch"
    n = int(inputs.size)
    if n == 0:
        raise ValueError("dice_bce_loss: empty input")

    x = jnp.ravel(inputs)    # keep native dtypes; cast to f32 inside the kernel
    t = jnp.ravel(targets)

    # Lane-dense 2D slab.  Only pad when n is not a multiple of 128; padded
    # zeros sit past `n` and are masked in-kernel anyway.
    rows = -(-n // LANES)
    full_rows, rem = divmod(n, LANES)
    n_lane = rows * LANES
    if n_lane != n:
        x = jnp.pad(x, (0, n_lane - n))
        t = jnp.pad(t, (0, n_lane - n))
    x2 = x.reshape(rows, LANES)
    t2 = t.reshape(rows, LANES)

    # dtype-aware sublane granularity: 8 for f32, 16 for bf16, 32 for int8/bool.
    def _gran(dt):
        return max(SUBLANES, 32 // max(1, jnp.dtype(dt).itemsize))
    gran = max(_gran(x2.dtype), _gran(t2.dtype))

    # Largest useful tile, rounded up to the sublane granularity.
    tile_rows = min(int(tile_rows), rows)
    tile_rows = max(gran, tile_rows + (-tile_rows) % gran)
    total_tiles = -(-rows // tile_rows)

    ncores = min(_num_tensorcores(), total_tiles)
    steps = -(-total_tiles // ncores)

    def in_map(c, i):
        # Clamp so the DMA source block is always in range; logically
        # out-of-range tiles are fully masked inside the kernel.
        return (jnp.minimum(c * steps + i, total_tiles - 1), 0)

    kernel = functools.partial(
        _dice_bce_kernel,
        full_rows=full_rows, rem=rem, steps=steps, tile_rows=tile_rows)

    # Double-buffered input blocks; raise the scoped-VMEM limit only when they
    # exceed the smallest default (v5e: 16 MiB).  Default tiles: f32 8192x128
    # -> 16 MiB -> 24 MiB limit, well inside every generation incl. v7x 64 MiB.
    buf_bytes = 2 * tile_rows * LANES * (x2.dtype.itemsize + t2.dtype.itemsize)
    vmem_limit = None
    if buf_bytes > 12 * 1024 * 1024:
        vmem_limit = buf_bytes + 8 * 1024 * 1024

    acc = pl.pallas_call(
        kernel,
        out_shape=jax.ShapeDtypeStruct((ncores, 3, SUBLANES, LANES), jnp.float32),
        grid_spec=pltpu.PrefetchScalarGridSpec(
            num_scalar_prefetch=0,
            grid=(ncores, steps),
            in_specs=[
                pl.BlockSpec((tile_rows, LANES), in_map),
                pl.BlockSpec((tile_rows, LANES), in_map),
            ],
            out_specs=pl.BlockSpec(
                (1, 3, SUBLANES, LANES), lambda c, i: (c, 0, 0, 0)),
        ),
        compiler_params=pltpu.CompilerParams(
            dimension_semantics=("parallel", "arbitrary"),
            vmem_limit_bytes=vmem_limit,
        ),
    )(x2, t2)

    # Tiny final combine (ncores*3*8*128 floats) done in plain JAX.
    sums = jnp.sum(acc, axis=(0, 2, 3))  # -> (3,)
    inter, sum_xt, ll_sum = sums[0], sums[1], sums[2]
    dice_loss = 1.0 - (2.0 * inter + smooth) / (sum_xt + smooth)
    bce = -ll_sum / n
    return bce + dice_loss


def _reference(x, t, smooth=1.0):
    xf = x.reshape(-1).astype(jnp.float32)
    tf = t.reshape(-1).astype(jnp.float32)
    inter = jnp.sum(xf * tf)
    dice = 1.0 - (2.0 * inter + smooth) / (jnp.sum(xf) + jnp.sum(tf) + smooth)
    bce = jnp.mean(-(tf * jnp.maximum(jnp.log(xf), -100.0)
                     + (1.0 - tf) * jnp.maximum(jnp.log(1.0 - xf), -100.0)))
    return bce + dice


if __name__ == "__main__":
    key = jax.random.PRNGKey(0)
    kx, kt, kx2, kt2 = jax.random.split(key, 4)

    # 1) NCHW probabilities vs binary targets (lane-aligned -> fast path).
    x = jax.random.uniform(kx, (2, 4, 16, 16), dtype=jnp.float32)
    t = (jax.random.uniform(kt, (2, 4, 16, 16)) > 0.5).astype(jnp.float32)
    loss = jax.block_until_ready(dice_bce_loss(x, t, smooth=1.0))
    ref = _reference(x, t, smooth=1.0)
    assert jnp.allclose(loss, ref, rtol=1e-5, atol=1e-5), (loss, ref)

    # 2) Ragged size (1957 elements, not a multiple of 128 -> masked tail path).
    x2 = jax.random.uniform(kx2, (19, 103), dtype=jnp.float32)
    t2 = (jax.random.uniform(kt2, (19, 103)) > 0.5).astype(jnp.float32)
    loss2 = jax.block_until_ready(dice_bce_loss(x2, t2, smooth=1.0))
    ref2 = _reference(x2, t2, smooth=1.0)
    assert jnp.allclose(loss2, ref2, rtol=1e-5, atol=1e-5), (loss2, ref2)

    print("KERNEL_OK")
</pallas_src>

<mosaic_0001>
module attributes {stable_mosaic.version = 11 : i64} {
  func.func @_dice_bce_kernel(%arg0: i32, %arg1: i32, %arg2: memref<16x128xf32, #tpu.memory_space<vmem>>, %arg3: memref<16x128xf32, #tpu.memory_space<vmem>>, %arg4: memref<1x3x8x128xf32, #tpu.memory_space<vmem>>) attributes {dimension_semantics = [#tpu.dimension_semantics<parallel>, #tpu.dimension_semantics<arbitrary>], iteration_bounds = array<i64: 1, 1>, scalar_prefetch = 0 : i64, scratch_operands = 0 : i64, tpu.core_type = #tpu.core_type<tc>, window_params = [{transform_indices = @transform_0, window_bounds = array<i64: 16, 128>}, {transform_indices = @transform_1, window_bounds = array<i64: 16, 128>}, {transform_indices = @transform_2, window_bounds = array<i64: 1, 3, 8, 128>}]} {
    %c0_i32 = arith.constant 0 : i32
    %0 = arith.cmpi eq, %arg1, %c0_i32 : i32
    %1 = arith.extui %0 : i1 to i32
    %c0_i32_0 = arith.constant 0 : i32
    %2 = arith.cmpi ne, %1, %c0_i32_0 : i32
    scf.if %2 {
      %cst = arith.constant 0.000000e+00 : f32
      %13 = vector.broadcast %cst : f32 to vector<1x3x8x128xf32>
      %c0 = arith.constant 0 : index
      %c0_5 = arith.constant 0 : index
      %c0_6 = arith.constant 0 : index
      %c0_7 = arith.constant 0 : index
      %14 = vector.load %arg4[%c0, %c0_5, %c0_6, %c0_7] : memref<1x3x8x128xf32, #tpu.memory_space<vmem>>, vector<1x3x8x128xf32>
      tpu.vector_store %arg4[%c0, %c0_5, %c0_6, %c0_7], %13 {strides = array<i32>} : memref<1x3x8x128xf32, #tpu.memory_space<vmem>>, vector<1x3x8x128xf32>,
    } else {
    }
    %c1_i32 = arith.constant 1 : i32
    %3 = arith.muli %arg0, %c1_i32 : i32
    %4 = arith.addi %3, %arg1 : i32
    %c16_i32 = arith.constant 16 : i32
    %5 = arith.muli %4, %c16_i32 : i32
    %c16_i32_1 = arith.constant 16 : i32
    %6 = arith.addi %5, %c16_i32_1 : i32
    %c16_i32_2 = arith.constant 16 : i32
    %7 = arith.cmpi sle, %6, %c16_i32_2 : i32
    %8 = arith.extui %7 : i1 to i32
    %c0_i32_3 = arith.constant 0 : i32
    %9 = arith.cmpi ne, %8, %c0_i32_3 : i32
    scf.if %9 {
      %c0 = arith.constant 0 : index
      %c0_5 = arith.constant 0 : index
      %13 = vector.load %arg2[%c0, %c0_5] : memref<16x128xf32, #tpu.memory_space<vmem>>, vector<16x128xf32>
      %c0_6 = arith.constant 0 : index
      %c0_7 = arith.constant 0 : index
      %14 = vector.load %arg3[%c0_6, %c0_7] : memref<16x128xf32, #tpu.memory_space<vmem>>, vector<16x128xf32>
      %15 = math.log %13 : vector<16x128xf32>
      %cst = arith.constant -1.000000e+02 : f32
      %16 = vector.broadcast %cst : f32 to vector<16x128xf32>
      %17 = arith.maximumf %15, %16 : vector<16x128xf32>
      %cst_8 = arith.constant 1.000000e+00 : f32
      %18 = vector.broadcast %cst_8 : f32 to vector<16x128xf32>
      %19 = arith.subf %18, %13 : vector<16x128xf32>
      %20 = math.log %19 : vector<16x128xf32>
      %cst_9 = arith.constant -1.000000e+02 : f32
      %21 = vector.broadcast %cst_9 : f32 to vector<16x128xf32>
      %22 = arith.maximumf %20, %21 : vector<16x128xf32>
      %23 = arith.mulf %13, %14 : vector<16x128xf32>
      %24 = arith.addf %13, %14 : vector<16x128xf32>
      %25 = arith.subf %17, %22 : vector<16x128xf32>
      %26 = arith.mulf %14, %25 : vector<16x128xf32>
      %27 = arith.addf %26, %22 : vector<16x128xf32>
      %c0_10 = arith.constant 0 : index
      %c0_11 = arith.constant 0 : index
      %c0_12 = arith.constant 0 : index
      %c0_13 = arith.constant 0 : index
      %28 = vector.load %arg4[%c0_10, %c0_11, %c0_12, %c0_13] : memref<1x3x8x128xf32, #tpu.memory_space<vmem>>, vector<1x1x8x128xf32>
      %29 = vector.shape_cast %28 : vector<1x1x8x128xf32> to vector<8x128xf32>
      %30 = vector.shape_cast %23 : vector<16x128xf32> to vector<2x8x128xf32>
      %cst_14 = arith.constant dense<0.000000e+00> : vector<8x128xf32>
      %31 = vector.multi_reduction <add>, %30, %cst_14 [0] : vector<2x8x128xf32> to vector<8x128xf32>
      %32 = arith.addf %29, %31 : vector<8x128xf32>
      %c0_15 = arith.constant 0 : index
      %c0_16 = arith.constant 0 : index
      %c0_17 = arith.constant 0 : index
      %c0_18 = arith.constant 0 : index
      %33 = vector.load %arg4[%c0_15, %c0_16, %c0_17, %c0_18] : memref<1x3x8x128xf32, #tpu.memory_space<vmem>>, vector<1x1x8x128xf32>
      %34 = vector.shape_cast %33 : vector<1x1x8x128xf32> to vector<8x128xf32>
      %35 = vector.shape_cast %32 : vector<8x128xf32> to vector<1x1x8x128xf32>
      tpu.vector_store %arg4[%c0_15, %c0_16, %c0_17, %c0_18], %35 {strides = array<i32>} : memref<1x3x8x128xf32, #tpu.memory_space<vmem>>, vector<1x1x8x128xf32>,
      %c0_19 = arith.constant 0 : index
      %c1 = arith.constant 1 : index
      %c0_20 = arith.constant 0 : index
      %c0_21 = arith.constant 0 : index
      %36 = vector.load %arg4[%c0_19, %c1, %c0_20, %c0_21] : memref<1x3x8x128xf32, #tpu.memory_space<vmem>>, vector<1x1x8x128xf32>
      %37 = vector.shape_cast %36 : vector<1x1x8x128xf32> to vector<8x128xf32>
      %38 = vector.shape_cast %24 : vector<16x128xf32> to vector<2x8x128xf32>
      %cst_22 = arith.constant dense<0.000000e+00> : vector<8x128xf32>
      %39 = vector.multi_reduction <add>, %38, %cst_22 [0] : vector<2x8x128xf32> to vector<8x128xf32>
      %40 = arith.addf %37, %39 : vector<8x128xf32>
      %c0_23 = arith.constant 0 : index
      %c1_24 = arith.constant 1 : index
      %c0_25 = arith.constant 0 : index
      %c0_26 = arith.constant 0 : index
      %41 = vector.load %arg4[%c0_23, %c1_24, %c0_25, %c0_26] : memref<1x3x8x128xf32, #tpu.memory_space<vmem>>, vector<1x1x8x128xf32>
      %42 = vector.shape_cast %41 : vector<1x1x8x128xf32> to vector<8x128xf32>
      %43 = vector.shape_cast %40 : vector<8x128xf32> to vector<1x1x8x128xf32>
      tpu.vector_store %arg4[%c0_23, %c1_24, %c0_25, %c0_26], %43 {strides = array<i32>} : memref<1x3x8x128xf32, #tpu.memory_space<vmem>>, vector<1x1x8x128xf32>,
      %c0_27 = arith.constant 0 : index
      %c2 = arith.constant 2 : index
      %c0_28 = arith.constant 0 : index
      %c0_29 = arith.constant 0 : index
      %44 = vector.load %arg4[%c0_27, %c2, %c0_28, %c0_29] : memref<1x3x8x128xf32, #tpu.memory_space<vmem>>, vector<1x1x8x128xf32>
      %45 = vector.shape_cast %44 : vector<1x1x8x128xf32> to vector<8x128xf32>
      %46 = vector.shape_cast %27 : vector<16x128xf32> to vector<2x8x128xf32>
      %cst_30 = arith.constant dense<0.000000e+00> : vector<8x128xf32>
      %47 = vector.multi_reduction <add>, %46, %cst_30 [0] : vector<2x8x128xf32> to vector<8x128xf32>
      %48 = arith.addf %45, %47 : vector<8x128xf32>
      %c0_31 = arith.constant 0 : index
      %c2_32 = arith.constant 2 : index
      %c0_33 = arith.constant 0 : index
      %c0_34 = arith.constant 0 : index
      %49 = vector.load %arg4[%c0_31, %c2_32, %c0_33, %c0_34] : memref<1x3x8x128xf32, #tpu.memory_space<vmem>>, vector<1x1x8x128xf32>
      %50 = vector.shape_cast %49 : vector<1x1x8x128xf32> to vector<8x128xf32>
      %51 = vector.shape_cast %48 : vector<8x128xf32> to vector<1x1x8x128xf32>
      tpu.vector_store %arg4[%c0_31, %c2_32, %c0_33, %c0_34], %51 {strides = array<i32>} : memref<1x3x8x128xf32, #tpu.memory_space<vmem>>, vector<1x1x8x128xf32>,
    } else {
    }
    %true = arith.constant true
    %10 = arith.xori %7, %true : i1
    %11 = arith.extui %10 : i1 to i32
    %c0_i32_4 = arith.constant 0 : i32
    %12 = arith.cmpi ne, %11, %c0_i32_4 : i32
    scf.if %12 {
      %c0 = arith.constant 0 : index
      %c0_5 = arith.constant 0 : index
      %13 = vector.load %arg2[%c0, %c0_5] : memref<16x128xf32, #tpu.memory_space<vmem>>, vector<16x128xf32>
      %c0_6 = arith.constant 0 : index
      %c0_7 = arith.constant 0 : index
      %14 = vector.load %arg3[%c0_6, %c0_7] : memref<16x128xf32, #tpu.memory_space<vmem>>, vector<16x128xf32>
      %15 = tpu.iota {dimensions = array<i32: 0>} : vector<16x128xi32>
      %16 = vector.broadcast %5 : i32 to vector<16x128xi32>
      %17 = arith.addi %15, %16 : vector<16x128xi32>
      %c16_i32_8 = arith.constant 16 : i32
      %18 = vector.broadcast %c16_i32_8 : i32 to vector<16x128xi32>
      %19 = arith.cmpi slt, %17, %18 : vector<16x128xi32>
      %cst = arith.constant 0.000000e+00 : f32
      %20 = vector.broadcast %cst : f32 to vector<16x128xf32>
      %21 = arith.select %19, %13, %20 : vector<16x128xi1>, vector<16x128xf32>
      %cst_9 = arith.constant 0.000000e+00 : f32
      %22 = vector.broadcast %cst_9 : f32 to vector<16x128xf32>
      %23 = arith.select %19, %14, %22 : vector<16x128xi1>, vector<16x128xf32>
      %24 = math.log %21 : vector<16x128xf32>
      %cst_10 = arith.constant -1.000000e+02 : f32
      %25 = vector.broadcast %cst_10 : f32 to vector<16x128xf32>
      %26 = arith.maximumf %24, %25 : vector<16x128xf32>
      %cst_11 = arith.constant 1.000000e+00 : f32
      %27 = vector.broadcast %cst_11 : f32 to vector<16x128xf32>
      %28 = arith.subf %27, %21 : vector<16x128xf32>
      %29 = math.log %28 : vector<16x128xf32>
      %cst_12 = arith.constant -1.000000e+02 : f32
      %30 = vector.broadcast %cst_12 : f32 to vector<16x128xf32>
      %31 = arith.maximumf %29, %30 : vector<16x128xf32>
      %32 = arith.mulf %21, %23 : vector<16x128xf32>
      %33 = arith.addf %21, %23 : vector<16x128xf32>
      %34 = arith.subf %26, %31 : vector<16x128xf32>
      %35 = arith.mulf %23, %34 : vector<16x128xf32>
      %36 = arith.addf %35, %31 : vector<16x128xf32>
      %c0_13 = arith.constant 0 : index
      %c0_14 = arith.constant 0 : index
      %c0_15 = arith.constant 0 : index
      %c0_16 = arith.constant 0 : index
      %37 = vector.load %arg4[%c0_13, %c0_14, %c0_15, %c0_16] : memref<1x3x8x128xf32, #tpu.memory_space<vmem>>, vector<1x1x8x128xf32>
      %38 = vector.shape_cast %37 : vector<1x1x8x128xf32> to vector<8x128xf32>
      %39 = vector.shape_cast %32 : vector<16x128xf32> to vector<2x8x128xf32>
      %cst_17 = arith.constant dense<0.000000e+00> : vector<8x128xf32>
      %40 = vector.multi_reduction <add>, %39, %cst_17 [0] : vector<2x8x128xf32> to vector<8x128xf32>
      %41 = arith.addf %38, %40 : vector<8x128xf32>
      %c0_18 = arith.constant 0 : index
      %c0_19 = arith.constant 0 : index
      %c0_20 = arith.constant 0 : index
      %c0_21 = arith.constant 0 : index
      %42 = vector.load %arg4[%c0_18, %c0_19, %c0_20, %c0_21] : memref<1x3x8x128xf32, #tpu.memory_space<vmem>>, vector<1x1x8x128xf32>
      %43 = vector.shape_cast %42 : vector<1x1x8x128xf32> to vector<8x128xf32>
      %44 = vector.shape_cast %41 : vector<8x128xf32> to vector<1x1x8x128xf32>
      tpu.vector_store %arg4[%c0_18, %c0_19, %c0_20, %c0_21], %44 {strides = array<i32>} : memref<1x3x8x128xf32, #tpu.memory_space<vmem>>, vector<1x1x8x128xf32>,
      %c0_22 = arith.constant 0 : index
      %c1 = arith.constant 1 : index
      %c0_23 = arith.constant 0 : index
      %c0_24 = arith.constant 0 : index
      %45 = vector.load %arg4[%c0_22, %c1, %c0_23, %c0_24] : memref<1x3x8x128xf32, #tpu.memory_space<vmem>>, vector<1x1x8x128xf32>
      %46 = vector.shape_cast %45 : vector<1x1x8x128xf32> to vector<8x128xf32>
      %47 = vector.shape_cast %33 : vector<16x128xf32> to vector<2x8x128xf32>
      %cst_25 = arith.constant dense<0.000000e+00> : vector<8x128xf32>
      %48 = vector.multi_reduction <add>, %47, %cst_25 [0] : vector<2x8x128xf32> to vector<8x128xf32>
      %49 = arith.addf %46, %48 : vector<8x128xf32>
      %c0_26 = arith.constant 0 : index
      %c1_27 = arith.constant 1 : index
      %c0_28 = arith.constant 0 : index
      %c0_29 = arith.constant 0 : index
      %50 = vector.load %arg4[%c0_26, %c1_27, %c0_28, %c0_29] : memref<1x3x8x128xf32, #tpu.memory_space<vmem>>, vector<1x1x8x128xf32>
      %51 = vector.shape_cast %50 : vector<1x1x8x128xf32> to vector<8x128xf32>
      %52 = vector.shape_cast %49 : vector<8x128xf32> to vector<1x1x8x128xf32>
      tpu.vector_store %arg4[%c0_26, %c1_27, %c0_28, %c0_29], %52 {strides = array<i32>} : memref<1x3x8x128xf32, #tpu.memory_space<vmem>>, vector<1x1x8x128xf32>,
      %c0_30 = arith.constant 0 : index
      %c2 = arith.constant 2 : index
      %c0_31 = arith.constant 0 : index
      %c0_32 = arith.constant 0 : index
      %53 = vector.load %arg4[%c0_30, %c2, %c0_31, %c0_32] : memref<1x3x8x128xf32, #tpu.memory_space<vmem>>, vector<1x1x8x128xf32>
      %54 = vector.shape_cast %53 : vector<1x1x8x128xf32> to vector<8x128xf32>
      %55 = vector.shape_cast %36 : vector<16x128xf32> to vector<2x8x128xf32>
      %cst_33 = arith.constant dense<0.000000e+00> : vector<8x128xf32>
      %56 = vector.multi_reduction <add>, %55, %cst_33 [0] : vector<2x8x128xf32> to vector<8x128xf32>
      %57 = arith.addf %54, %56 : vector<8x128xf32>
      %c0_34 = arith.constant 0 : index
      %c2_35 = arith.constant 2 : index
      %c0_36 = arith.constant 0 : index
      %c0_37 = arith.constant 0 : index
      %58 = vector.load %arg4[%c0_34, %c2_35, %c0_36, %c0_37] : memref<1x3x8x128xf32, #tpu.memory_space<vmem>>, vector<1x1x8x128xf32>
      %59 = vector.shape_cast %58 : vector<1x1x8x128xf32> to vector<8x128xf32>
      %60 = vector.shape_cast %57 : vector<8x128xf32> to vector<1x1x8x128xf32>
      tpu.vector_store %arg4[%c0_34, %c2_35, %c0_36, %c0_37], %60 {strides = array<i32>} : memref<1x3x8x128xf32, #tpu.memory_space<vmem>>, vector<1x1x8x128xf32>,
    } else {
    }
    return
  }
  func.func @transform_0(%arg0: i32, %arg1: i32) -> (i32, i32) {
    %c1_i32 = arith.constant 1 : i32
    %0 = arith.muli %arg0, %c1_i32 : i32
    %1 = arith.addi %0, %arg1 : i32
    %c0_i32 = arith.constant 0 : i32
    %2 = arith.minsi %1, %c0_i32 : i32
    %c0_i32_0 = arith.constant 0 : i32
    %c0_i32_1 = arith.constant 0 : i32
    return %2, %c0_i32_0 : i32, i32
  }
  func.func @transform_1(%arg0: i32, %arg1: i32) -> (i32, i32) {
    %c1_i32 = arith.constant 1 : i32
    %0 = arith.muli %arg0, %c1_i32 : i32
    %1 = arith.addi %0, %arg1 : i32
    %c0_i32 = arith.constant 0 : i32
    %2 = arith.minsi %1, %c0_i32 : i32
    %c0_i32_0 = arith.constant 0 : i32
    %c0_i32_1 = arith.constant 0 : i32
    return %2, %c0_i32_0 : i32, i32
  }
  func.func @transform_2(%arg0: i32, %arg1: i32) -> (i32, i32, i32, i32) {
    %c0_i32 = arith.constant 0 : i32
    %c0_i32_0 = arith.constant 0 : i32
    %c0_i32_1 = arith.constant 0 : i32
    %c0_i32_2 = arith.constant 0 : i32
    return %arg0, %c0_i32, %c0_i32_0, %c0_i32_1 : i32, i32, i32, i32
  }
}

</mosaic_0001>

<llo_original>
// kernel: tpu_custom_call.1
$region0: #{tpu_custom_call.1}
  #allocation0 [shape = 'u32[]', space=smem, size = 0x4, offset = 0x4, fixed_abs, tag = 'smem constant byte address 0x4 - core index']
  #allocation1 [shape = 'u32[144,128]{1,0:T(1,128)}', space=vmem, size = 0x12000, scoped, tag = 'internal scratch']
  %s0 = inlined_call_operand.hbm [shape: f32[16,128], index: 0, kind: input, shape index: {}]
  %s1 = inlined_call_operand.hbm [shape: f32[16,128], index: 1, kind: input, shape index: {}]
  %s2 = inlined_call_operand.hbm [shape: f32[1,3,8,128], index: 2, kind: output, shape index: {}]
  %s3 = sld [smem:[#allocation0]]
  $region38: #{tpu_custom_call.1} parent=0
    _
  %s5 = ssub.s32 1, %s3
  %s6 = scalar_select 0, %s5, %s3
  $region1: #{tpu_custom_call.1} parent=0
    #allocation2 [shape = 'u8[8192]{0}', space=vmem, size = 0x2000, scoped, tag = 'input window, operand 0, single buffered']
    #allocation3 [shape = 's32[1]{0}', space=sflag, size = 0x4, scoped, tag = 'scoped memory for tpu_custom_call.1']
    #allocation4 [shape = 's32[1]{0}', space=sflag, size = 0x4, scoped, tag = 'scoped memory for tpu_custom_call.1']
    #allocation5 [shape = 'u8[8192]{0}', space=vmem, size = 0x2000, scoped, tag = 'input window, operand 1, single buffered']
    #allocation6 [shape = 's32[1]{0}', space=sflag, size = 0x4, scoped, tag = 'scoped memory for tpu_custom_call.1']
    #allocation7 [shape = 'u8[12288]{0}', space=vmem, size = 0x3000, scoped, tag = 'output window, operand 0, single buffered']
    %7 = vsyncpa [#allocation3], 0
    %8 = vsyncpa [#allocation6], 0
    %9 = vsyncpa [#allocation4], 0
    // Predicated region
    $region2: #{tpu_custom_call.1} parent=1 // pred_check
      _
    $region3: #{tpu_custom_call.1} parent=1 // pred_check_branch
      %11 = sbr.rel (0) target = $region5
    $region4: #{tpu_custom_call.1} parent=1 // pred_region
      %s12 = sadd.s32 0, 0
      %p13 = scmp.lt.s32.totalorder %s12, 0
      %s14 = scalar_select %p13, %s12, 0
      %s15 = smul.u32 2, %s14
      %s17 = ssub.s32 256, 256
      %18 = vsyncadd [#allocation3], %s17
      %s19 = smul.addr %s15, 128
      %s20 = scalar_lea.hbm %s0, %s19
      %s21 = sshll.u32 [#allocation2], 4
      %s22 = int_to_ptr.vmem [resolvable:$true] %s21
      %27 = dma.hbm_to_vmem [thread:$0]  %s20, 256, %s22, [#allocation3], 128, 128, 8
    $region5: #{tpu_custom_call.1} parent=1 // pred_fallthru
      _
    // Predicated region
    $region6: #{tpu_custom_call.1} parent=1 // pred_check
      _
    $region7: #{tpu_custom_call.1} parent=1 // pred_check_branch
      %29 = sbr.rel (0) target = $region9
    $region8: #{tpu_custom_call.1} parent=1 // pred_region
      %s30 = sadd.s32 0, 0
      %p31 = scmp.lt.s32.totalorder %s30, 0
      %s32 = scalar_select %p31, %s30, 0
      %s33 = smul.u32 2, %s32
      %s35 = ssub.s32 256, 256
      %36 = vsyncadd [#allocation6], %s35
      %s37 = smul.addr %s33, 128
      %s38 = scalar_lea.hbm %s1, %s37
      %s39 = sshll.u32 [#allocation5], 4
      %s40 = int_to_ptr.vmem [resolvable:$true] %s39
      %45 = dma.hbm_to_vmem [thread:$0]  %s38, 256, %s40, [#allocation6], 128, 128, 8
    $region9: #{tpu_custom_call.1} parent=1 // pred_fallthru
      _
    // Predicated region
    $region10: #{tpu_custom_call.1} parent=1 // pred_check
      _
    $region11: #{tpu_custom_call.1} parent=1 // pred_check_branch
      %47 = sbr.rel (0) target = $region13
    $region12: #{tpu_custom_call.1} parent=1 // pred_region
      %48 = dma.done [#allocation3], 256
    $region13: #{tpu_custom_call.1} parent=1 // pred_fallthru
      _
    // Predicated region
    $region14: #{tpu_custom_call.1} parent=1 // pred_check
      _
    $region15: #{tpu_custom_call.1} parent=1 // pred_check_branch
      %50 = sbr.rel (0) target = $region17
    $region16: #{tpu_custom_call.1} parent=1 // pred_region
      %51 = dma.done [#allocation6], 256
    $region17: #{tpu_custom_call.1} parent=1 // pred_fallthru
      _
    %s52 = sadd.s32 0, 0
    %p53 = scmp.lt.s32.totalorder %s52, 0
    %s54 = scalar_select %p53, %s52, 0
    %s55 = smul.u32 2, %s54
    %s56 = sadd.s32 0, 0
    %p57 = scmp.lt.s32.totalorder %s56, 0
    %s58 = scalar_select %p57, %s56, 0
    %s59 = smul.u32 2, %s58
    %p60 = scmp.eq.s32.totalorder 0, 0
    // Predicated region
    $region18: #{tpu_custom_call.1} parent=1 // pred_check
      %p61 = pneg %p60
    $region19: #{tpu_custom_call.1} parent=1 // pred_check_branch
      %63 = sbr.rel (%p61) target = $region21
    $region20: #{tpu_custom_call.1} parent=1 // pred_region
      %64 = vst [vmem:[#allocation7] sm:$0xff] 0.0
      %65 = vst [vmem:[#allocation7 + $0x8] sm:$0xff] 0.0
      %66 = vst [vmem:[#allocation7 + $0x10] sm:$0xff] 0.0
    $region21: #{tpu_custom_call.1} parent=1 // pred_fallthru
      _
    %s67 = sadd.s32 0, 0
    %s68 = smul.u32 %s67, 16
    %s69 = sadd.s32 %s68, 16
    %p70 = scmp.le.s32.totalorder %s69, 16
    // Predicated region
    $region22: #{tpu_custom_call.1} parent=1 // pred_check
      %p71 = pneg %p70
    $region23: #{tpu_custom_call.1} parent=1 // pred_check_branch
      %73 = sbr.rel (%p71) target = $region25
    $region24: #{tpu_custom_call.1} parent=1 // pred_region
      %v74 = vld [vmem:[#allocation2] sm:$0xff]
      %v75 = vld [vmem:[#allocation2 + $0x8] sm:$0xff]
      %v76 = vld [vmem:[#allocation5] sm:$0xff]
      %v77 = vld [vmem:[#allocation5 + $0x8] sm:$0xff]
      %v78 = vlog2.pop %v74
      %v79 = vmul.f32 %v78, 0.6931472
      %v80 = vlog2.pop %v75
      %v81 = vmul.f32 %v80, 0.6931472
      %v82 = vmax.f32 %v79, -100.0
      %v83 = vmax.f32 %v81, -100.0
      %v84 = vsub.f32 1.0, %v74
      %v85 = vsub.f32 1.0, %v75
      %v86 = vlog2.pop %v84
      %v87 = vmul.f32 %v86, 0.6931472
      %v88 = vlog2.pop %v85
      %v89 = vmul.f32 %v88, 0.6931472
      %v90 = vmax.f32 %v87, -100.0
      %v91 = vmax.f32 %v89, -100.0
      %v92 = vmul.f32 %v74, %v76
      %v93 = vmul.f32 %v75, %v77
      %v94 = vadd.f32 %v74, %v76
      %v95 = vadd.f32 %v75, %v77
      %v96 = vsub.f32 %v82, %v90
      %v97 = vsub.f32 %v83, %v91
      %v98 = vmul.f32 %v76, %v96
      %v99 = vmul.f32 %v77, %v97
      %v100 = vadd.f32 %v98, %v90
      %v101 = vadd.f32 %v99, %v91
      %v102 = vld [vmem:[#allocation7] sm:$0xff]
      %v103 = vadd.f32 %v92, %v93
      %v104 = vadd.f32 %v102, %v103
      %105 = vst [vmem:[#allocation7] sm:$0xff] %v104
      %s106 = scalar_lea.vmem [#allocation7], 8
      %v107 = vld [vmem:[%s106] sm:$0xff]
      %v108 = vadd.f32 %v94, %v95
      %v109 = vadd.f32 %v107, %v108
      %110 = vst [vmem:[%s106] sm:$0xff] %v109
      %s111 = scalar_lea.vmem [#allocation7], 16
      %v112 = vld [vmem:[%s111] sm:$0xff]
      %v113 = vadd.f32 %v100, %v101
      %v114 = vadd.f32 %v112, %v113
      %115 = vst [vmem:[%s111] sm:$0xff] %v114
    $region25: #{tpu_custom_call.1} parent=1 // pred_fallthru
      _
    %p116 = scmp.gt.s32.totalorder %s69, 16
    // Predicated region
    $region26: #{tpu_custom_call.1} parent=1 // pred_check
      %p117 = pneg %p116
    $region27: #{tpu_custom_call.1} parent=1 // pred_check_branch
      %119 = sbr.rel (%p117) target = $region29
    $region28: #{tpu_custom_call.1} parent=1 // pred_region
      %v120 = vld [vmem:[#allocation2] sm:$0xff]
      %v121 = vld [vmem:[#allocation2 + $0x8] sm:$0xff]
      %v122 = vld [vmem:[#allocation5] sm:$0xff]
      %v123 = vld [vmem:[#allocation5 + $0x8] sm:$0xff]
      %v124 = vlaneseq
      %v125 = vshrl.u32 %v124, 7
      %v126 = vadd.s32 %v125, 8
      %v127 = vstv %s68
      %v128 = vadd.s32 %v125, %v127
      %v129 = vadd.s32 %v126, %v127
      %vm130 = vcmp.lt.s32.totalorder %v128, 16
      %vm131 = vcmp.lt.s32.totalorder %v129, 16
      %v132 = vsel %vm130, %v120, 0.0
      %v133 = vsel %vm131, %v121, 0.0
      %v134 = vsel %vm130, %v122, 0.0
      %v135 = vsel %vm131, %v123, 0.0
      %v136 = vlog2.pop %v132
      %v137 = vmul.f32 %v136, 0.6931472
      %v138 = vlog2.pop %v133
      %v139 = vmul.f32 %v138, 0.6931472
      %v140 = vmax.f32 %v137, -100.0
      %v141 = vmax.f32 %v139, -100.0
      %v142 = vsub.f32 1.0, %v132
      %v143 = vsub.f32 1.0, %v133
      %v144 = vlog2.pop %v142
      %v145 = vmul.f32 %v144, 0.6931472
      %v146 = vlog2.pop %v143
      %v147 = vmul.f32 %v146, 0.6931472
      %v148 = vmax.f32 %v145, -100.0
      %v149 = vmax.f32 %v147, -100.0
      %v150 = vmul.f32 %v132, %v134
      %v151 = vmul.f32 %v133, %v135
      %v152 = vadd.f32 %v132, %v134
      %v153 = vadd.f32 %v133, %v135
      %v154 = vsub.f32 %v140, %v148
      %v155 = vsub.f32 %v141, %v149
      %v156 = vmul.f32 %v134, %v154
      %v157 = vmul.f32 %v135, %v155
      %v158 = vadd.f32 %v156, %v148
      %v159 = vadd.f32 %v157, %v149
      %v160 = vld [vmem:[#allocation7] sm:$0xff]
      %v161 = vadd.f32 %v150, %v151
      %v162 = vadd.f32 %v160, %v161
      %163 = vst [vmem:[#allocation7] sm:$0xff] %v162
      %s164 = scalar_lea.vmem [#allocation7], 8
      %v165 = vld [vmem:[%s164] sm:$0xff]
      %v166 = vadd.f32 %v152, %v153
      %v167 = vadd.f32 %v165, %v166
      %168 = vst [vmem:[%s164] sm:$0xff] %v167
      %s169 = scalar_lea.vmem [#allocation7], 16
      %v170 = vld [vmem:[%s169] sm:$0xff]
      %v171 = vadd.f32 %v158, %v159
      %v172 = vadd.f32 %v170, %v171
      %173 = vst [vmem:[%s169] sm:$0xff] %v172
    $region29: #{tpu_custom_call.1} parent=1 // pred_fallthru
      _
    // Predicated region
    $region30: #{tpu_custom_call.1} parent=1 // pred_check
      _
    $region31: #{tpu_custom_call.1} parent=1 // pred_check_branch
      %175 = sbr.rel (0) target = $region33
    $region32: #{tpu_custom_call.1} parent=1 // pred_region
      %s177 = ssub.s32 384, 384
      %178 = vsyncadd [#allocation4], %s177
      %s179 = sshll.u32 [#allocation7], 4
      %s180 = int_to_ptr.vmem [resolvable:$true] %s179
      %185 = dma.vmem_to_hbm [thread:$0]  %s180, 384, %s2, [#allocation4], 128, 128, 8
    $region33: #{tpu_custom_call.1} parent=1 // pred_fallthru
      _
    // Predicated region
    $region34: #{tpu_custom_call.1} parent=1 // pred_check
      _
    $region35: #{tpu_custom_call.1} parent=1 // pred_check_branch
      %187 = sbr.rel (0) target = $region37
    $region36: #{tpu_custom_call.1} parent=1 // pred_region
      %188 = dma.done [#allocation4], 384
    $region37: #{tpu_custom_call.1} parent=1 // pred_fallthru
      _
    %189 = vsyncpa [#allocation3], 1
    %190 = vsyncpa [#allocation6], 1
    %191 = vsyncpa [#allocation4], 1

</llo_original>
